<compile_context>
chip_gen: v7x
topology: tpu7x:2x2x1
jax: 0.10.0
libtpu: 0.0.40
codegen_flags: <defaults>
</compile_context>

<pallas_src>
import jax
import jax.numpy as jnp
from jax.experimental import pallas as pl
from jax.experimental.pallas import tpu as pltpu


def _round_up(x, m):
    return ((x + m - 1) // m) * m


# ----------------------------------------------------------------------------
# Pallas kernel: fused "concat + nn.Linear" head, tiled over the vocab axis.
#   logits[:, jTN:(j+1)TN] = t @ W_txt[:, tile] + i @ W_img[:, tile] + b[tile]
# (the torch.cat is folded away by splitting W along its input rows)
# ----------------------------------------------------------------------------
def fusion_fc_kernel(xt_ref, xi_ref, wt_ref, wi_ref, b_ref, o_ref):
    # xt: [BP, Ht] bf16, xi: [BP, Hi] bf16      (resident, fetched once)
    # wt: [Ht, TN] bf16, wi: [Hi, TN] bf16      (streamed vocab tiles)
    # b : [1, TN]  f32,  o : [BP, TN] f32
    acc = jnp.dot(xt_ref[...], wt_ref[...], preferred_element_type=jnp.float32)
    acc = acc + jnp.dot(xi_ref[...], wi_ref[...],
                        preferred_element_type=jnp.float32)
    o_ref[...] = acc + b_ref[...]


def prepare_head_params(params, text_hidden):
    """One-time weight prep: bf16 cast + pad vocab to a multiple of 128.

    Done once (outside the forward), so the per-call kernel only reads bf16
    weight bytes and no f32->bf16 pad/cast XLA op runs per forward.
    """
    fc_w = params["fc_w"]                       # [Ht+Hi, V] f32 (merged)
    fc_b = params["fc_b"]                       # [V] f32
    K, V = fc_w.shape
    VP = _round_up(V, 128)                      # pad lanes only, not to TN
    w_pad = jnp.zeros((K, VP), jnp.bfloat16).at[:, :V].set(
        fc_w.astype(jnp.bfloat16))
    b_pad = jnp.zeros((1, VP), jnp.float32).at[:, :V].set(
        fc_b.reshape(1, V).astype(jnp.float32))
    return {
        "w_txt_head": w_pad[:text_hidden],      # [Ht, VP] bf16
        "w_img_head": w_pad[text_hidden:],      # [Hi, VP] bf16
        "b_head": b_pad,                        # [1, VP]  f32
        "vocab_size": V,                        # static python int
    }


def fusion_fc(text_feat, image_feat, head, *, tn_target=8192):
    """text_feat [B, Ht], image_feat [B, Hi]  ->  logits [B, V] (f32)."""
    B, Ht = text_feat.shape
    Hi = image_feat.shape[1]
    VP = head["w_txt_head"].shape[1]
    V = head["vocab_size"]

    # f32-output sublane pad only (8 rows); lane density comes from TN%128==0.
    BP = max(8, _round_up(B, 8))
    xt = jnp.zeros((BP, Ht), jnp.bfloat16).at[:B].set(
        text_feat.astype(jnp.bfloat16))
    xi = jnp.zeros((BP, Hi), jnp.bfloat16).at[:B].set(
        image_feat.astype(jnp.bfloat16))

    # Large vocab tiles (weight-streaming GEMV is per-step-overhead bound at
    # small TN), but keep >=2 tiles when possible so v7x's two TCs both work.
    TN = min(tn_target, VP)
    if VP > 128 and TN == VP:
        TN = _round_up(pl.cdiv(VP, 2), 128)
    grid = pl.cdiv(VP, TN)

    K = Ht + Hi
    cost = pl.CostEstimate(
        flops=2 * BP * K * VP,
        transcendentals=0,
        bytes_accessed=K * VP * 2 + VP * 4 + BP * K * 2 + BP * VP * 4,
    )

    out = pl.pallas_call(
        fusion_fc_kernel,
        out_shape=jax.ShapeDtypeStruct((BP, VP), jnp.float32),
        grid_spec=pltpu.PrefetchScalarGridSpec(
            num_scalar_prefetch=0,
            grid=(grid,),
            in_specs=[
                pl.BlockSpec((BP, Ht), lambda j: (0, 0)),   # text feat (resident)
                pl.BlockSpec((BP, Hi), lambda j: (0, 0)),   # image feat (resident)
                pl.BlockSpec((Ht, TN), lambda j: (0, j)),   # W text-half tile
                pl.BlockSpec((Hi, TN), lambda j: (0, j)),   # W image-half tile
                pl.BlockSpec((1, TN), lambda j: (0, j)),    # bias tile
            ],
            out_specs=pl.BlockSpec((BP, TN), lambda j: (0, j)),
        ),
        compiler_params=pltpu.CompilerParams(
            dimension_semantics=("parallel",)),             # vocab tiles across TCs
        cost_estimate=cost,
    )(xt, xi, head["w_txt_head"], head["w_img_head"], head["b_head"])
    return out[:B, :V]


# ----------------------------------------------------------------------------
# Synthetic stand-in backbones (plain JAX glue), sliced before their dense
# layer so only the last-token / last-patch feature is ever computed.
# ----------------------------------------------------------------------------
def text_last_feature(input_ids, params):
    # stand-in for text_model(...).hidden_states[-1][:, -1, :]
    emb_last = params["embed"][input_ids[:, -1]]                    # [B, Ht]
    return jnp.tanh(emb_last @ params["w_txt"] + params["b_txt"])   # [B, Ht]


def image_last_feature(pixel_values, params):
    # stand-in for image_model(...).last_hidden_state[:, -1, :]
    # (last patch in row-major patch order == bottom-right 8x8 patch)
    B, C, H, W = pixel_values.shape
    P = 8
    last_patch = pixel_values[:, :, H - P:, W - P:]                 # [B, C, P, P]
    x = last_patch.reshape(B, C * P * P)                            # [B, C*P*P]
    return jnp.tanh(x @ params["w_img"] + params["b_img"])          # [B, Hi]


def multimodal_forward(input_ids, attention_mask, pixel_values, params, head):
    # attention_mask gates attention inside a real causal LM and does not zero
    # hidden states; the original module indexes position -1 unconditionally,
    # so the mask is unused by the synthetic per-token encoder tail.
    del attention_mask
    text_last = text_last_feature(input_ids, params)                # [B, Ht]
    image_last = image_last_feature(pixel_values, params)           # [B, Hi]
    # concat happens inside the Pallas kernel (two dots vs. split W halves)
    return fusion_fc(text_last, image_last, head)                   # [B, V]


# ----------------------------------------------------------------------------
# Deterministic parameter init + smoke test
# ----------------------------------------------------------------------------
def init_params(key, vocab_size, text_hidden, image_hidden, patch_dim):
    ks = jax.random.split(key, 6)
    s = 0.02
    return {
        "embed": jax.random.normal(ks[0], (vocab_size, text_hidden), jnp.float32) * s,
        "w_txt": jax.random.normal(ks[1], (text_hidden, text_hidden), jnp.float32) * s,
        "b_txt": jnp.zeros((text_hidden,), jnp.float32),
        "w_img": jax.random.normal(ks[2], (patch_dim, image_hidden), jnp.float32) * s,
        "b_img": jnp.zeros((image_hidden,), jnp.float32),
        # fc: single Linear(text_hidden + image_hidden -> vocab_size), stored
        # merged in f32 (reference); bf16 head copies are prepared once below.
        "fc_w": jax.random.normal(ks[3], (text_hidden + image_hidden, vocab_size),
                                  jnp.float32) * s,
        "fc_b": jax.random.normal(ks[4], (vocab_size,), jnp.float32) * s,
    }


if __name__ == "__main__":
    B, S = 2, 8
    C, H, W = 3, 16, 16
    TEXT_HIDDEN, IMAGE_HIDDEN = 32, 32
    VOCAB = 1024                      # small, but exercises the multi-tile grid
    PATCH_DIM = C * 8 * 8

    key = jax.random.PRNGKey(0)
    k_ids, k_pix, k_par = jax.random.split(key, 3)

    input_ids = jax.random.randint(k_ids, (B, S), 0, VOCAB, dtype=jnp.int32)
    attention_mask = jnp.ones((B, S), jnp.int32)
    pixel_values = jax.random.normal(k_pix, (B, C, H, W), jnp.float32)
    params = init_params(k_par, VOCAB, TEXT_HIDDEN, IMAGE_HIDDEN, PATCH_DIM)

    # One-time bf16 weight prep (stored; not redone per forward).
    head = prepare_head_params(params, TEXT_HIDDEN)

    logits = multimodal_forward(input_ids, attention_mask, pixel_values,
                                params, head)
    logits = jax.block_until_ready(logits)

    # Reference check: plain-JAX concat + matmul with the SAME bf16-cast
    # operands (kernel uses bf16 MXU inputs + f32 accumulation), loosened tol.
    text_last = text_last_feature(input_ids, params)
    image_last = image_last_feature(pixel_values, params)
    combined = jnp.concatenate([text_last, image_last], axis=1)
    ref = (combined.astype(jnp.bfloat16).astype(jnp.float32)
           @ params["fc_w"].astype(jnp.bfloat16).astype(jnp.float32)
           + params["fc_b"].reshape(1, -1))

    assert logits.shape == (B, VOCAB)
    assert jnp.allclose(logits, ref, atol=2e-3, rtol=2e-3)

    print("KERNEL_OK")
</pallas_src>

<mosaic_0001>
module attributes {stable_mosaic.version = 11 : i64} {
  func.func @fusion_fc_kernel(%arg0: i32, %arg1: memref<8x32xbf16, #tpu.memory_space<vmem>>, %arg2: memref<8x32xbf16, #tpu.memory_space<vmem>>, %arg3: memref<32x512xbf16, #tpu.memory_space<vmem>>, %arg4: memref<32x512xbf16, #tpu.memory_space<vmem>>, %arg5: memref<1x512xf32, #tpu.memory_space<vmem>>, %arg6: memref<8x512xf32, #tpu.memory_space<vmem>>) attributes {dimension_semantics = [#tpu.dimension_semantics<parallel>], iteration_bounds = array<i64: 2>, scalar_prefetch = 0 : i64, scratch_operands = 0 : i64, tpu.core_type = #tpu.core_type<tc>, window_params = [{pipeline_mode = #tpu.pipeline_mode<synchronous>, transform_indices = @transform_0, window_bounds = array<i64: 8, 32>}, {pipeline_mode = #tpu.pipeline_mode<synchronous>, transform_indices = @transform_1, window_bounds = array<i64: 8, 32>}, {transform_indices = @transform_2, window_bounds = array<i64: 32, 512>}, {transform_indices = @transform_3, window_bounds = array<i64: 32, 512>}, {transform_indices = @transform_4, window_bounds = array<i64: 1, 512>}, {transform_indices = @transform_5, window_bounds = array<i64: 8, 512>}]} {
    %c0 = arith.constant 0 : index
    %c0_0 = arith.constant 0 : index
    %0 = vector.load %arg1[%c0, %c0_0] : memref<8x32xbf16, #tpu.memory_space<vmem>>, vector<8x32xbf16>
    %c0_1 = arith.constant 0 : index
    %c0_2 = arith.constant 0 : index
    %1 = vector.load %arg3[%c0_1, %c0_2] : memref<32x512xbf16, #tpu.memory_space<vmem>>, vector<32x512xbf16>
    %cst = arith.constant dense<0.000000e+00> : vector<8x512xf32>
    %2 = tpu.matmul %0, %1, %cst {dimension_numbers = #tpu.dot_dimension_numbers<[1], [0], [0], [1], [0, 0, 1, 1], [], []>} : vector<8x32xbf16>, vector<32x512xbf16>, vector<8x512xf32> -> vector<8x512xf32>
    %c0_3 = arith.constant 0 : index
    %c0_4 = arith.constant 0 : index
    %3 = vector.load %arg2[%c0_3, %c0_4] : memref<8x32xbf16, #tpu.memory_space<vmem>>, vector<8x32xbf16>
    %c0_5 = arith.constant 0 : index
    %c0_6 = arith.constant 0 : index
    %4 = vector.load %arg4[%c0_5, %c0_6] : memref<32x512xbf16, #tpu.memory_space<vmem>>, vector<32x512xbf16>
    %cst_7 = arith.constant dense<0.000000e+00> : vector<8x512xf32>
    %5 = tpu.matmul %3, %4, %cst_7 {dimension_numbers = #tpu.dot_dimension_numbers<[1], [0], [0], [1], [0, 0, 1, 1], [], []>} : vector<8x32xbf16>, vector<32x512xbf16>, vector<8x512xf32> -> vector<8x512xf32>
    %6 = arith.addf %2, %5 : vector<8x512xf32>
    %c0_8 = arith.constant 0 : index
    %c0_9 = arith.constant 0 : index
    %7 = vector.load %arg5[%c0_8, %c0_9] : memref<1x512xf32, #tpu.memory_space<vmem>>, vector<1x512xf32>
    %8 = vector.broadcast %7 : vector<1x512xf32> to vector<8x512xf32>
    %9 = arith.addf %6, %8 : vector<8x512xf32>
    %c0_10 = arith.constant 0 : index
    %c0_11 = arith.constant 0 : index
    %10 = vector.load %arg6[%c0_10, %c0_11] : memref<8x512xf32, #tpu.memory_space<vmem>>, vector<8x512xf32>
    tpu.vector_store %arg6[%c0_10, %c0_11], %9 {strides = array<i32>} : memref<8x512xf32, #tpu.memory_space<vmem>>, vector<8x512xf32>,
    return
  }
  func.func @transform_0(%arg0: i32) -> (i32, i32) {
    %c0_i32 = arith.constant 0 : i32
    %c0_i32_0 = arith.constant 0 : i32
    %c0_i32_1 = arith.constant 0 : i32
    return %c0_i32, %c0_i32_0 : i32, i32
  }
  func.func @transform_1(%arg0: i32) -> (i32, i32) {
    %c0_i32 = arith.constant 0 : i32
    %c0_i32_0 = arith.constant 0 : i32
    %c0_i32_1 = arith.constant 0 : i32
    return %c0_i32, %c0_i32_0 : i32, i32
  }
  func.func @transform_2(%arg0: i32) -> (i32, i32) {
    %c0_i32 = arith.constant 0 : i32
    %c0_i32_0 = arith.constant 0 : i32
    return %c0_i32, %arg0 : i32, i32
  }
  func.func @transform_3(%arg0: i32) -> (i32, i32) {
    %c0_i32 = arith.constant 0 : i32
    %c0_i32_0 = arith.constant 0 : i32
    return %c0_i32, %arg0 : i32, i32
  }
  func.func @transform_4(%arg0: i32) -> (i32, i32) {
    %c0_i32 = arith.constant 0 : i32
    %c0_i32_0 = arith.constant 0 : i32
    return %c0_i32, %arg0 : i32, i32
  }
  func.func @transform_5(%arg0: i32) -> (i32, i32) {
    %c0_i32 = arith.constant 0 : i32
    %c0_i32_0 = arith.constant 0 : i32
    return %c0_i32, %arg0 : i32, i32
  }
}

</mosaic_0001>

<llo_original>
// kernel: tpu_custom_call.1
$region0: #{tpu_custom_call.1}
  #allocation0 [shape = 'u32[]', space=smem, size = 0x4, offset = 0x4, fixed_abs, tag = 'smem constant byte address 0x4 - core index']
  #allocation1 [shape = 'u32[144,128]{1,0:T(1,128)}', space=vmem, size = 0x12000, scoped, tag = 'internal scratch']
  %s0 = inlined_call_operand.hbm [shape: bf16[8,32], index: 0, kind: input, shape index: {}]
  %s1 = inlined_call_operand.hbm [shape: bf16[8,32], index: 1, kind: input, shape index: {}]
  %s2 = inlined_call_operand.hbm [shape: bf16[32,1024], index: 2, kind: input, shape index: {}]
  %s3 = inlined_call_operand.hbm [shape: bf16[32,1024], index: 3, kind: input, shape index: {}]
  %s4 = inlined_call_operand.vmem [shape: f32[1,1024], index: 4, kind: input, shape index: {}]
  %s5 = inlined_call_operand.hbm [shape: f32[8,1024], index: 5, kind: output, shape index: {}]
  %s6 = sld [smem:[#allocation0]]
  $region69: #{tpu_custom_call.1} parent=0
    _
  %s8 = ssub.s32 1, %s6
  %s9 = scalar_select 0, %s8, %s6
  $region1: #{tpu_custom_call.1} parent=0
    #allocation2 [shape = 'u8[2048]{0}', space=vmem, size = 0x800, scoped, tag = 'input window, operand 0, single buffered']
    #allocation3 [shape = 's32[2]{0}', space=sflag, size = 0x8, scoped, tag = 'scoped memory for tpu_custom_call.1']
    #allocation4 [shape = 's32[2]{0}', space=sflag, size = 0x8, scoped, tag = 'scoped memory for tpu_custom_call.1']
    #allocation5 [shape = 'u8[2048]{0}', space=vmem, size = 0x800, scoped, tag = 'input window, operand 1, single buffered']
    #allocation6 [shape = 's32[1]{0}', space=sflag, size = 0x4, scoped, tag = 'scoped memory for tpu_custom_call.1']
    #allocation7 [shape = 'u8[65536]{0}', space=vmem, size = 0x10000, scoped, tag = 'input window, operand 2']
    #allocation8 [shape = 'u8[65536]{0}', space=vmem, size = 0x10000, scoped, tag = 'input window, operand 3']
    #allocation9 [shape = 'u8[32768]{0}', space=vmem, size = 0x8000, scoped, tag = 'output window, operand 0']
    %10 = vsyncpa [#allocation3], 0
    %11 = vsyncpa [#allocation6], 0
    %12 = vsyncpa [#allocation4], 0
    %s13 = scalar_lea.sflag [#allocation4], 1
    %14 = vsyncpa %s13, 0
    loop: start=0, step=1, limit=4
    $region2: #{tpu_custom_call.1} parent=1 // loop_pre_header
      _
    $region3: #{tpu_custom_call.1} parent=1 // loop_header
      %s16 = sphi 0, %s20
      %p17 = scmp.ge.s32.totalorder %s16, 4
      %s24 = sphi 0, %s24
      %s26 = sphi 0, %s24
      %s27 = sphi 0, %s26
      %s41 = sphi 0, %s27
      %s45 = sphi 0, %s45
      %s47 = sphi 0, %s45
      %s48 = sphi 0, %s47
      %s62 = sphi 0, %s48
      %s68 = sphi 0, %s70
      %s71 = sphi 0, %s68
      %s72 = sphi 0, %s71
      %s88 = sphi 0, %s72
      %s94 = sphi 0, %s96
      %s97 = sphi 0, %s94
      %s98 = sphi 0, %s97
      %s114 = sphi 0, %s98
      %s120 = sphi 0, %s122
      %s123 = sphi 0, %s120
      %s124 = sphi 0, %s123
      %s140 = sphi 0, %s124
      %s146 = sphi 0, %s148
      %s149 = sphi 0, %s146
      %s150 = sphi 0, %s149
      %s166 = sphi 0, %s150
    $region4: #{tpu_custom_call.1} parent=1 // loop_header_branch
      %19 = sbr.rel (%p17) target = $region8
    $region5: #{tpu_custom_call.1} parent=1 // loop_body
      %s21 = ssub.s32 %s16, 1
      %s22 = ssub.s32 %s16, 2
      %s23 = sadd.s32 %s16, 1
      %s25 = sadd.s32 %s24, 1
      %p28 = scmp.eq.s32.totalorder %s16, 1
      %p29 = scmp.ne.s32.totalorder %s24, %s26
      %p30 = scmp.eq.s32.totalorder %s16, 0
      %p31 = por %p29, %p30
      %p32 = scmp.ne.s32.totalorder %s24, %s26
      %p33 = scmp.eq.s32.totalorder %s21, 1
      %p34 = por %p32, %p33
      %p35 = scmp.ne.s32.totalorder %s26, %s27
      %p36 = scmp.eq.s32.totalorder %s21, 0
      %p37 = por %p35, %p36
      %p38 = scmp.ne.s32.totalorder %s26, %s27
      %p39 = scmp.eq.s32.totalorder %s22, 1
      %p40 = por %p38, %p39
      %p42 = scmp.ne.s32.totalorder %s27, %s41
      %p43 = scmp.eq.s32.totalorder %s22, 0
      %p44 = por %p42, %p43
      %s46 = sadd.s32 %s45, 1
      %p49 = scmp.eq.s32.totalorder %s16, 1
      %p50 = scmp.ne.s32.totalorder %s45, %s47
      %p51 = scmp.eq.s32.totalorder %s16, 0
      %p52 = por %p50, %p51
      %p53 = scmp.ne.s32.totalorder %s45, %s47
      %p54 = scmp.eq.s32.totalorder %s21, 1
      %p55 = por %p53, %p54
      %p56 = scmp.ne.s32.totalorder %s47, %s48
      %p57 = scmp.eq.s32.totalorder %s21, 0
      %p58 = por %p56, %p57
      %p59 = scmp.ne.s32.totalorder %s47, %s48
      %p60 = scmp.eq.s32.totalorder %s22, 1
      %p61 = por %p59, %p60
      %p63 = scmp.ne.s32.totalorder %s48, %s62
      %p64 = scmp.eq.s32.totalorder %s22, 0
      %p65 = por %p63, %p64
      %s66 = ssub.s32 %s16, %s23
      %p67 = scmp.eq.s32.totalorder %s66, 0
      %s69 = sadd.s32 %s68, 1
      %s70 = scalar_select %p67, %s68, %s69
      %p73 = pneg %p67
      %p74 = scmp.eq.s32.totalorder %s16, 1
      %p75 = por %p73, %p74
      %p76 = scmp.ne.s32.totalorder %s68, %s71
      %p77 = scmp.eq.s32.totalorder %s16, 0
      %p78 = por %p76, %p77
      %p79 = scmp.ne.s32.totalorder %s68, %s71
      %p80 = scmp.eq.s32.totalorder %s21, 1
      %p81 = por %p79, %p80
      %p82 = scmp.ne.s32.totalorder %s71, %s72
      %p83 = scmp.eq.s32.totalorder %s21, 0
      %p84 = por %p82, %p83
      %p85 = scmp.ne.s32.totalorder %s71, %s72
      %p86 = scmp.eq.s32.totalorder %s22, 1
      %p87 = por %p85, %p86
      %p89 = scmp.ne.s32.totalorder %s72, %s88
      %p90 = scmp.eq.s32.totalorder %s22, 0
      %p91 = por %p89, %p90
      %s92 = ssub.s32 %s16, %s23
      %p93 = scmp.eq.s32.totalorder %s92, 0
      %s95 = sadd.s32 %s94, 1
      %s96 = scalar_select %p93, %s94, %s95
      %p99 = pneg %p93
      %p100 = scmp.eq.s32.totalorder %s16, 1
      %p101 = por %p99, %p100
      %p102 = scmp.ne.s32.totalorder %s94, %s97
      %p103 = scmp.eq.s32.totalorder %s16, 0
      %p104 = por %p102, %p103
      %p105 = scmp.ne.s32.totalorder %s94, %s97
      %p106 = scmp.eq.s32.totalorder %s21, 1
      %p107 = por %p105, %p106
      %p108 = scmp.ne.s32.totalorder %s97, %s98
      %p109 = scmp.eq.s32.totalorder %s21, 0
      %p110 = por %p108, %p109
      %p111 = scmp.ne.s32.totalorder %s97, %s98
      %p112 = scmp.eq.s32.totalorder %s22, 1
      %p113 = por %p111, %p112
      %p115 = scmp.ne.s32.totalorder %s98, %s114
      %p116 = scmp.eq.s32.totalorder %s22, 0
      %p117 = por %p115, %p116
      %s118 = ssub.s32 %s16, %s23
      %p119 = scmp.eq.s32.totalorder %s118, 0
      %s121 = sadd.s32 %s120, 1
      %s122 = scalar_select %p119, %s120, %s121
      %p125 = pneg %p119
      %p126 = scmp.eq.s32.totalorder %s16, 1
      %p127 = por %p125, %p126
      %p128 = scmp.ne.s32.totalorder %s120, %s123
      %p129 = scmp.eq.s32.totalorder %s16, 0
      %p130 = por %p128, %p129
      %p131 = scmp.ne.s32.totalorder %s120, %s123
      %p132 = scmp.eq.s32.totalorder %s21, 1
      %p133 = por %p131, %p132
      %p134 = scmp.ne.s32.totalorder %s123, %s124
      %p135 = scmp.eq.s32.totalorder %s21, 0
      %p136 = por %p134, %p135
      %p137 = scmp.ne.s32.totalorder %s123, %s124
      %p138 = scmp.eq.s32.totalorder %s22, 1
      %p139 = por %p137, %p138
      %p141 = scmp.ne.s32.totalorder %s124, %s140
      %p142 = scmp.eq.s32.totalorder %s22, 0
      %p143 = por %p141, %p142
      %s144 = ssub.s32 %s16, %s23
      %p145 = scmp.eq.s32.totalorder %s144, 0
      %s147 = sadd.s32 %s146, 1
      %s148 = scalar_select %p145, %s146, %s147
      %p151 = pneg %p145
      %p152 = scmp.eq.s32.totalorder %s16, 1
      %p153 = por %p151, %p152
      %p154 = scmp.ne.s32.totalorder %s146, %s149
      %p155 = scmp.eq.s32.totalorder %s16, 0
      %p156 = por %p154, %p155
      %p157 = scmp.ne.s32.totalorder %s146, %s149
      %p158 = scmp.eq.s32.totalorder %s21, 1
      %p159 = por %p157, %p158
      %p160 = scmp.ne.s32.totalorder %s149, %s150
      %p161 = scmp.eq.s32.totalorder %s21, 0
      %p162 = por %p160, %p161
      %p163 = scmp.ne.s32.totalorder %s149, %s150
      %p164 = scmp.eq.s32.totalorder %s22, 1
      %p165 = por %p163, %p164
      %p167 = scmp.ne.s32.totalorder %s150, %s166
      %p168 = scmp.eq.s32.totalorder %s22, 0
      %p169 = por %p167, %p168
      %p170 = scmp.le.s32.totalorder 1, %s16
      %p171 = scmp.lt.s32.totalorder %s16, 3
      %p172 = pnand %p170, %p171
      %p173 = pneg %p172
      // Predicated region
      $region9: #{tpu_custom_call.1} parent=5 // pred_check
        _
      $region10: #{tpu_custom_call.1} parent=5 // pred_check_branch
        %175 = sbr.rel (%p172) target = $region12
      $region11: #{tpu_custom_call.1} parent=5 // pred_region
        %s176 = ssub.s32 %s16, 1
        // Predicated region
        $region13: #{tpu_custom_call.1} parent=11 // pred_check
          %p177 = pneg %p37
        $region14: #{tpu_custom_call.1} parent=11 // pred_check_branch
          %179 = sbr.rel (%p177) target = $region16
        $region15: #{tpu_custom_call.1} parent=11 // pred_region
          %s181 = ssub.s32 64, 64
          %182 = vsyncadd [#allocation3], %s181
          %s184 = sshll.u32 [#allocation2], 4
          %s185 = int_to_ptr.vmem [resolvable:$true] %s184
          %187 = dma.hbm_to_vmem [thread:$0]  %s0, 64, %s185, [#allocation3]
        $region16: #{tpu_custom_call.1} parent=11 // pred_fallthru
          _
        // Predicated region
        $region17: #{tpu_custom_call.1} parent=11 // pred_check
          %p188 = pneg %p58
        $region18: #{tpu_custom_call.1} parent=11 // pred_check_branch
          %190 = sbr.rel (%p188) target = $region20
        $region19: #{tpu_custom_call.1} parent=11 // pred_region
          %s192 = ssub.s32 64, 64
          %193 = vsyncadd [#allocation6], %s192
          %s195 = sshll.u32 [#allocation5], 4
          %s196 = int_to_ptr.vmem [resolvable:$true] %s195
          %198 = dma.hbm_to_vmem [thread:$0]  %s1, 64, %s196, [#allocation6]
        $region20: #{tpu_custom_call.1} parent=11 // pred_fallthru
          _
      $region12: #{tpu_custom_call.1} parent=5 // pred_fallthru
        _
      %p199 = scmp.lt.s32.totalorder %s16, 2
      // Predicated region
      $region21: #{tpu_custom_call.1} parent=5 // pred_check
        %p200 = pneg %p199
      $region22: #{tpu_custom_call.1} parent=5 // pred_check_branch
        %202 = sbr.rel (%p200) target = $region24
      $region23: #{tpu_custom_call.1} parent=5 // pred_region
        // Predicated region
        $region25: #{tpu_custom_call.1} parent=23 // pred_check
          %p203 = pneg %p78
        $region26: #{tpu_custom_call.1} parent=23 // pred_check_branch
          %205 = sbr.rel (%p203) target = $region28
        $region27: #{tpu_custom_call.1} parent=23 // pred_region
          %s206 = sand.u32 %s16, 1
          %s207 = scalar_lea.sflag [#allocation3], %s206
          %s208 = sand.u32 %s68, 1
          %s209 = smul.addr %s208, 64
          %s210 = scalar_lea.vmem [#allocation7], %s209
          %s211 = smul.u32 4, %s16
          %s213 = ssub.s32 1024, 1024
          %214 = vsyncadd %s207, %s213
          %s215 = smul.addr %s211, 64
          %s216 = scalar_lea.hbm %s2, %s215
          %s217 = sshll.u32 %s210, 4
          %s218 = int_to_ptr.vmem [resolvable:$true] %s217
          %223 = dma.hbm_to_vmem [thread:$0]  %s216, 1024, %s218, %s207, 512, 256, 16
        $region28: #{tpu_custom_call.1} parent=23 // pred_fallthru
          _
        // Predicated region
        $region29: #{tpu_custom_call.1} parent=23 // pred_check
          %p224 = pneg %p104
        $region30: #{tpu_custom_call.1} parent=23 // pred_check_branch
          %226 = sbr.rel (%p224) target = $region32
        $region31: #{tpu_custom_call.1} parent=23 // pred_region
          %s227 = sand.u32 %s16, 1
          %s228 = scalar_lea.sflag [#allocation3], %s227
          %s229 = sand.u32 %s94, 1
          %s230 = smul.addr %s229, 64
          %s231 = scalar_lea.vmem [#allocation8], %s230
          %s232 = smul.u32 4, %s16
          %s234 = ssub.s32 1024, 1024
          %235 = vsyncadd %s228, %s234
          %s236 = smul.addr %s232, 64
          %s237 = scalar_lea.hbm %s3, %s236
          %s238 = sshll.u32 %s231, 4
          %s239 = int_to_ptr.vmem [resolvable:$true] %s238
          %244 = dma.hbm_to_vmem [thread:$0]  %s237, 1024, %s239, %s228, 512, 256, 16
        $region32: #{tpu_custom_call.1} parent=23 // pred_fallthru
          _
        // Predicated region
        $region33: #{tpu_custom_call.1} parent=23 // pred_check
          %p245 = pneg %p130
        $region34: #{tpu_custom_call.1} parent=23 // pred_check_branch
          %247 = sbr.rel (%p245) target = $region36
        $region35: #{tpu_custom_call.1} parent=23 // pred_region
          %s248 = smul.u32 4, %s16
          %p249 = scmp.lt.s32.totalorder %s248, 7
          %s250 = scalar_select %p249, %s248, 7
          %s251 = scalar_lea.vmem %s4, %s250
          %s252 = smul.u32 4, %s16
        $region36: #{tpu_custom_call.1} parent=23 // pred_fallthru
          _
      $region24: #{tpu_custom_call.1} parent=5 // pred_fallthru
        _
      %p253 = scmp.le.s32.totalorder 1, %s16
      %p254 = scmp.lt.s32.totalorder %s16, 3
      %p255 = pnand %p253, %p254
      %p256 = pneg %p255
      // Predicated region
      $region37: #{tpu_custom_call.1} parent=5 // pred_check
        _
      $region38: #{tpu_custom_call.1} parent=5 // pred_check_branch
        %258 = sbr.rel (%p255) target = $region40
      $region39: #{tpu_custom_call.1} parent=5 // pred_region
        %s259 = ssub.s32 %s16, 1
        // Predicated region
        $region41: #{tpu_custom_call.1} parent=39 // pred_check
          %p260 = pneg %p37
        $region42: #{tpu_custom_call.1} parent=39 // pred_check_branch
          %262 = sbr.rel (%p260) target = $region44
        $region43: #{tpu_custom_call.1} parent=39 // pred_region
          %263 = dma.done [#allocation3], 64
        $region44: #{tpu_custom_call.1} parent=39 // pred_fallthru
          _
        // Predicated region
        $region45: #{tpu_custom_call.1} parent=39 // pred_check
          %p264 = pneg %p58
        $region46: #{tpu_custom_call.1} parent=39 // pred_check_branch
          %266 = sbr.rel (%p264) target = $region48
        $region47: #{tpu_custom_call.1} parent=39 // pred_region
          %267 = dma.done [#allocation6], 64
        $region48: #{tpu_custom_call.1} parent=39 // pred_fallthru
          _
        %s268 = sand.u32 %s21, 1
        %s269 = scalar_lea.sflag [#allocation3], %s268
        %s270 = sand.u32 %s71, 1
        %s271 = smul.addr %s270, 64
        %s272 = scalar_lea.vmem [#allocation7], %s271
        // Predicated region
        $region49: #{tpu_custom_call.1} parent=39 // pred_check
          %p273 = pneg %p84
        $region50: #{tpu_custom_call.1} parent=39 // pred_check_branch
          %275 = sbr.rel (%p273) target = $region52
        $region51: #{tpu_custom_call.1} parent=39 // pred_region
          %276 = dma.done %s269, 1024
        $region52: #{tpu_custom_call.1} parent=39 // pred_fallthru
          _
        %s277 = sand.u32 %s21, 1
        %s278 = scalar_lea.sflag [#allocation3], %s277
        %s279 = sand.u32 %s97, 1
        %s280 = smul.addr %s279, 64
        %s281 = scalar_lea.vmem [#allocation8], %s280
        // Predicated region
        $region53: #{tpu_custom_call.1} parent=39 // pred_check
          %p282 = pneg %p110
        $region54: #{tpu_custom_call.1} parent=39 // pred_check_branch
          %284 = sbr.rel (%p282) target = $region56
        $region55: #{tpu_custom_call.1} parent=39 // pred_region
          %285 = dma.done %s278, 1024
        $region56: #{tpu_custom_call.1} parent=39 // pred_fallthru
          _
        %p286 = pneg %p37
        %p287 = pneg %p34
        %p288 = pneg %p58
        %p289 = pneg %p55
        %s290 = sand.u32 %s21, 1
        %s291 = scalar_lea.sflag [#allocation3], %s290
        %s292 = sand.u32 %s71, 1
        %s293 = smul.addr %s292, 64
        %s294 = scalar_lea.vmem [#allocation7], %s293
        %p295 = pneg %p84
        %p296 = pneg %p81
        %s297 = sand.u32 %s21, 1
        %s298 = scalar_lea.sflag [#allocation3], %s297
        %s299 = sand.u32 %s97, 1
        %s300 = smul.addr %s299, 64
        %s301 = scalar_lea.vmem [#allocation8], %s300
        %p302 = pneg %p110
        %p303 = pneg %p107
        %s304 = smul.u32 4, %s21
        %p305 = scmp.lt.s32.totalorder %s304, 7
        %s306 = scalar_select %p305, %s304, 7
        %s307 = scalar_lea.vmem %s4, %s306
        %p308 = pneg %p136
        %p309 = pneg %p133
        %p310 = pneg %p162
        %p311 = pneg %p159
        %s312 = sand.u32 %s149, 1
        %s313 = scalar_lea.sflag [#allocation4], %s312
        %s314 = sand.u32 %s149, 1
        %s315 = smul.addr %s314, 32
        %s316 = scalar_lea.vmem [#allocation9], %s315
        %s317 = smul.u32 4, %s21
        %s318 = smul.u32 4, %s21
        %s319 = smul.u32 4, %s21
        %p320 = scmp.lt.s32.totalorder %s319, 7
        %s321 = scalar_select %p320, %s319, 7
        %s322 = scalar_lea.vmem %s4, %s321
        %s323 = smul.u32 4, %s21
        %s324 = smul.u32 4, %s21
        %v326 = vld [vmem:[#allocation2] sm:$0xf]
        %v327 = vld [vmem:[%s272] sm:$0xff]
        %v328 = vld [vmem:[%s272 + $0x8] sm:$0xff]
        %v329 = vld [vmem:[%s272 + $0x10] sm:$0xff]
        %v330 = vld [vmem:[%s272 + $0x18] sm:$0xff]
        %v331 = vld [vmem:[%s272 + $0x20] sm:$0xff]
        %v332 = vld [vmem:[%s272 + $0x28] sm:$0xff]
        %v333 = vld [vmem:[%s272 + $0x30] sm:$0xff]
        %v334 = vld [vmem:[%s272 + $0x38] sm:$0xff]
        %v335 = vld [vmem:[#allocation5] sm:$0xf]
        %v336 = vld [vmem:[%s281] sm:$0xff]
        %v337 = vld [vmem:[%s281 + $0x8] sm:$0xff]
        %v338 = vld [vmem:[%s281 + $0x10] sm:$0xff]
        %v339 = vld [vmem:[%s281 + $0x18] sm:$0xff]
        %v340 = vld [vmem:[%s281 + $0x20] sm:$0xff]
        %v341 = vld [vmem:[%s281 + $0x28] sm:$0xff]
        %v342 = vld [vmem:[%s281 + $0x30] sm:$0xff]
        %v343 = vld [vmem:[%s281 + $0x38] sm:$0xff]
        %v352 = vunpack.c.l.b16 %v336
        %v353 = vunpack.c.h.b16 %v336
        %v354 = vunpack.c.l.b16 %v337
        %v355 = vunpack.c.h.b16 %v337
        %v356 = vunpack.c.l.b16 %v338
        %v357 = vunpack.c.h.b16 %v338
        %v358 = vunpack.c.l.b16 %v339
        %v359 = vunpack.c.h.b16 %v339
        %v360 = vunpack.c.l.b16 %v340
        %v361 = vunpack.c.h.b16 %v340
        %v362 = vunpack.c.l.b16 %v341
        %v363 = vunpack.c.h.b16 %v341
        %v364 = vunpack.c.l.b16 %v342
        %v365 = vunpack.c.h.b16 %v342
        %v366 = vunpack.c.l.b16 %v343
        %v367 = vunpack.c.h.b16 %v343
        %v368 = vpack.c.b16 %v356, %v352
        %v369 = vpack.c.b16 %v357, %v353
        %v370 = vpack.c.b16 %v358, %v354
        %v371 = vpack.c.b16 %v359, %v355
        %v372 = vpack.c.b16 %v364, %v360
        %v373 = vpack.c.b16 %v365, %v361
        %v374 = vpack.c.b16 %v366, %v362
        %v375 = vpack.c.b16 %v367, %v363
        %vm384 = vcmask 261120
        %v386 = vsel %vm384, %v335, 0
        %388 = vmatprep.subr.bf16.mxu0 %v369
        %389 = vmatpush1.bf16.msra.mxu0 %v368
        %390 = vmatprep.subr.bf16.mxu0 %v373
        %391 = vmatpush1.bf16.msra.mxu0 %v372
        %392 = vmatprep.subr.bf16.mxu0 0
        %393 = vmatpush1.bf16.msra.mxu0 0
        %394 = vmatprep.subr.bf16.mxu0 0
        %395 = vmatpush1.bf16.msra.mxu0 0
        %396 = vmatprep.subr.bf16.mxu0 0
        %397 = vmatpush1.bf16.msra.mxu0 0
        %398 = vmatprep.subr.bf16.mxu0 0
        %399 = vmatpush1.bf16.msra.mxu0 0
        %400 = vmatprep.subr.bf16.mxu0 0
        %401 = vmatpush1.bf16.msra.mxu0 0
        %402 = vmatprep.subr.bf16.mxu0 0
        %403 = vmatpush1.bf16.msra.mxu0 0
        %404 = vmatprep.subr.bf16.mxu0 0
        %405 = vmatpush1.bf16.msra.mxu0 0
        %406 = vmatprep.subr.bf16.mxu0 0
        %407 = vmatpush1.bf16.msra.mxu0 0
        %408 = vmatprep.subr.bf16.mxu0 0
        %409 = vmatpush1.bf16.msra.mxu0 0
        %410 = vmatprep.subr.bf16.mxu0 0
        %411 = vmatpush1.bf16.msra.mxu0 0
        %412 = vmatprep.subr.bf16.mxu0 0
        %413 = vmatpush1.bf16.msra.mxu0 0
        %414 = vmatprep.subr.bf16.mxu0 0
        %415 = vmatpush1.bf16.msra.mxu0 0
        %416 = vmatprep.subr.bf16.mxu0 0
        %417 = vmatpush1.bf16.msra.mxu0 0
        %418 = vmatprep.subr.bf16.mxu0 0
        %419 = vmatpush1.bf16.msra.mxu0 0
        %420 = vmatprep.mubr.bf16.mxu0 0
        %421 = vmatmul.mubr.bf16.gmra.mrb[0].mxu0 %v386
        %v422 = vpop.f32.mrb[0].mxu0
        %v423 = vadd.f32 0.0, %v422
        %v424 = vpop.f32.mrb[0].mxu0
        %v425 = vadd.f32 0.0, %v424
        %v426 = vpop.f32.mrb[0].mxu0
        %v427 = vpop.f32.mrb[0].mxu0
        %428 = vdwg.mxu0
        %429 = vmatprep.subr.bf16.mxu0 %v371
        %430 = vmatpush1.bf16.msra.mxu0 %v370
        %431 = vmatprep.subr.bf16.mxu0 %v375
        %432 = vmatpush1.bf16.msra.mxu0 %v374
        %433 = vmatprep.subr.bf16.mxu0 0
        %434 = vmatpush1.bf16.msra.mxu0 0
        %435 = vmatprep.subr.bf16.mxu0 0
        %436 = vmatpush1.bf16.msra.mxu0 0
        %437 = vmatprep.subr.bf16.mxu0 0
        %438 = vmatpush1.bf16.msra.mxu0 0
        %439 = vmatprep.subr.bf16.mxu0 0
        %440 = vmatpush1.bf16.msra.mxu0 0
        %441 = vmatprep.subr.bf16.mxu0 0
        %442 = vmatpush1.bf16.msra.mxu0 0
        %443 = vmatprep.subr.bf16.mxu0 0
        %444 = vmatpush1.bf16.msra.mxu0 0
        %445 = vmatprep.subr.bf16.mxu0 0
        %446 = vmatpush1.bf16.msra.mxu0 0
        %447 = vmatprep.subr.bf16.mxu0 0
        %448 = vmatpush1.bf16.msra.mxu0 0
        %449 = vmatprep.subr.bf16.mxu0 0
        %450 = vmatpush1.bf16.msra.mxu0 0
        %451 = vmatprep.subr.bf16.mxu0 0
        %452 = vmatpush1.bf16.msra.mxu0 0
        %453 = vmatprep.subr.bf16.mxu0 0
        %454 = vmatpush1.bf16.msra.mxu0 0
        %455 = vmatprep.subr.bf16.mxu0 0
        %456 = vmatpush1.bf16.msra.mxu0 0
        %457 = vmatprep.subr.bf16.mxu0 0
        %458 = vmatpush1.bf16.msra.mxu0 0
        %459 = vmatprep.subr.bf16.mxu0 0
        %460 = vmatpush1.bf16.msra.mxu0 0
        %461 = vmatprep.mubr.bf16.mxu0 0
        %462 = vmatmul.mubr.bf16.gmra.mrb[0].mxu0 %v386
        %v463 = vpop.f32.mrb[0].mxu0
        %v464 = vadd.f32 0.0, %v463
        %v465 = vpop.f32.mrb[0].mxu0
        %v466 = vadd.f32 0.0, %v465
        %v467 = vpop.f32.mrb[0].mxu0
        %v468 = vpop.f32.mrb[0].mxu0
        %469 = vdwg.mxu0
        %v478 = vunpack.c.l.b16 %v327
        %v479 = vunpack.c.h.b16 %v327
        %v480 = vunpack.c.l.b16 %v328
        %v481 = vunpack.c.h.b16 %v328
        %v482 = vunpack.c.l.b16 %v329
        %v483 = vunpack.c.h.b16 %v329
        %v484 = vunpack.c.l.b16 %v330
        %v485 = vunpack.c.h.b16 %v330
        %v486 = vunpack.c.l.b16 %v331
        %v487 = vunpack.c.h.b16 %v331
        %v488 = vunpack.c.l.b16 %v332
        %v489 = vunpack.c.h.b16 %v332
        %v490 = vunpack.c.l.b16 %v333
        %v491 = vunpack.c.h.b16 %v333
        %v492 = vunpack.c.l.b16 %v334
        %v493 = vunpack.c.h.b16 %v334
        %v494 = vpack.c.b16 %v482, %v478
        %v495 = vpack.c.b16 %v483, %v479
        %v496 = vpack.c.b16 %v484, %v480
        %v497 = vpack.c.b16 %v485, %v481
        %v498 = vpack.c.b16 %v490, %v486
        %v499 = vpack.c.b16 %v491, %v487
        %v500 = vpack.c.b16 %v492, %v488
        %v501 = vpack.c.b16 %v493, %v489
        %v511 = vsel %vm384, %v326, 0
        %513 = vmatprep.subr.bf16.mxu0 %v495
        %514 = vmatpush1.bf16.msra.mxu0 %v494
        %515 = vmatprep.subr.bf16.mxu0 %v499
        %516 = vmatpush1.bf16.msra.mxu0 %v498
        %517 = vmatprep.subr.bf16.mxu0 0
        %518 = vmatpush1.bf16.msra.mxu0 0
        %519 = vmatprep.subr.bf16.mxu0 0
        %520 = vmatpush1.bf16.msra.mxu0 0
        %521 = vmatprep.subr.bf16.mxu0 0
        %522 = vmatpush1.bf16.msra.mxu0 0
        %523 = vmatprep.subr.bf16.mxu0 0
        %524 = vmatpush1.bf16.msra.mxu0 0
        %525 = vmatprep.subr.bf16.mxu0 0
        %526 = vmatpush1.bf16.msra.mxu0 0
        %527 = vmatprep.subr.bf16.mxu0 0
        %528 = vmatpush1.bf16.msra.mxu0 0
        %529 = vmatprep.subr.bf16.mxu0 0
        %530 = vmatpush1.bf16.msra.mxu0 0
        %531 = vmatprep.subr.bf16.mxu0 0
        %532 = vmatpush1.bf16.msra.mxu0 0
        %533 = vmatprep.subr.bf16.mxu0 0
        %534 = vmatpush1.bf16.msra.mxu0 0
        %535 = vmatprep.subr.bf16.mxu0 0
        %536 = vmatpush1.bf16.msra.mxu0 0
        %537 = vmatprep.subr.bf16.mxu0 0
        %538 = vmatpush1.bf16.msra.mxu0 0
        %539 = vmatprep.subr.bf16.mxu0 0
        %540 = vmatpush1.bf16.msra.mxu0 0
        %541 = vmatprep.subr.bf16.mxu0 0
        %542 = vmatpush1.bf16.msra.mxu0 0
        %543 = vmatprep.subr.bf16.mxu0 0
        %544 = vmatpush1.bf16.msra.mxu0 0
        %545 = vmatprep.mubr.bf16.mxu0 0
        %546 = vmatmul.mubr.bf16.gmra.mrb[0].mxu0 %v511
        %v547 = vpop.f32.mrb[0].mxu0
        %v548 = vadd.f32 %v423, %v547
        %v549 = vpop.f32.mrb[0].mxu0
        %v550 = vadd.f32 %v425, %v549
        %v551 = vpop.f32.mrb[0].mxu0
        %v552 = vpop.f32.mrb[0].mxu0
        %553 = vdwg.mxu0
        %554 = vmatprep.subr.bf16.mxu0 %v497
        %555 = vmatpush1.bf16.msra.mxu0 %v496
        %556 = vmatprep.subr.bf16.mxu0 %v501
        %557 = vmatpush1.bf16.msra.mxu0 %v500
        %558 = vmatprep.subr.bf16.mxu0 0
        %559 = vmatpush1.bf16.msra.mxu0 0
        %560 = vmatprep.subr.bf16.mxu0 0
        %561 = vmatpush1.bf16.msra.mxu0 0
        %562 = vmatprep.subr.bf16.mxu0 0
        %563 = vmatpush1.bf16.msra.mxu0 0
        %564 = vmatprep.subr.bf16.mxu0 0
        %565 = vmatpush1.bf16.msra.mxu0 0
        %566 = vmatprep.subr.bf16.mxu0 0
        %567 = vmatpush1.bf16.msra.mxu0 0
        %568 = vmatprep.subr.bf16.mxu0 0
        %569 = vmatpush1.bf16.msra.mxu0 0
        %570 = vmatprep.subr.bf16.mxu0 0
        %571 = vmatpush1.bf16.msra.mxu0 0
        %572 = vmatprep.subr.bf16.mxu0 0
        %573 = vmatpush1.bf16.msra.mxu0 0
        %574 = vmatprep.subr.bf16.mxu0 0
        %575 = vmatpush1.bf16.msra.mxu0 0
        %576 = vmatprep.subr.bf16.mxu0 0
        %577 = vmatpush1.bf16.msra.mxu0 0
        %578 = vmatprep.subr.bf16.mxu0 0
        %579 = vmatpush1.bf16.msra.mxu0 0
        %580 = vmatprep.subr.bf16.mxu0 0
        %581 = vmatpush1.bf16.msra.mxu0 0
        %582 = vmatprep.subr.bf16.mxu0 0
        %583 = vmatpush1.bf16.msra.mxu0 0
        %584 = vmatprep.subr.bf16.mxu0 0
        %585 = vmatpush1.bf16.msra.mxu0 0
        %586 = vmatprep.mubr.bf16.mxu0 0
        %587 = vmatmul.mubr.bf16.gmra.mrb[0].mxu0 %v511
        %v588 = vpop.f32.mrb[0].mxu0
        %v589 = vadd.f32 %v464, %v588
        %v590 = vpop.f32.mrb[0].mxu0
        %v591 = vadd.f32 %v466, %v590
        %v592 = vpop.f32.mrb[0].mxu0
        %v593 = vpop.f32.mrb[0].mxu0
        %594 = vdwg.mxu0
        %v595 = vld [vmem:[%s322] sm:$0xf]
        %v597 = vlaneseq
        %v598 = vshrl.u32 %v597, 7
        %v599 = vsub.s32 0, %v598
        %v600 = vrot.slane %v595, %v599
        %v601 = vlaneseq
        %v602 = vshrl.u32 %v601, 7
        %v603 = vsub.s32 1, %v602
        %v604 = vrot.slane %v595, %v603
        %v605 = vlaneseq
        %v606 = vshrl.u32 %v605, 7
        %v607 = vsub.s32 2, %v606
        %v608 = vrot.slane %v595, %v607
        %v609 = vlaneseq
        %v610 = vshrl.u32 %v609, 7
        %v611 = vsub.s32 3, %v610
        %v612 = vrot.slane %v595, %v611
        %v617 = vadd.f32 %v548, %v600
        %v618 = vadd.f32 %v550, %v604
        %v619 = vadd.f32 %v589, %v608
        %v620 = vadd.f32 %v591, %v612
        %621 = vst [vmem:[%s316] sm:$0xff] %v617
        %622 = vst [vmem:[%s316 + $0x8] sm:$0xff] %v618
        %623 = vst [vmem:[%s316 + $0x10] sm:$0xff] %v619
        %624 = vst [vmem:[%s316 + $0x18] sm:$0xff] %v620
        %s625 = sand.u32 %s149, 1
        %s626 = scalar_lea.sflag [#allocation4], %s625
        %s627 = sand.u32 %s149, 1
        %s628 = smul.addr %s627, 32
        %s629 = scalar_lea.vmem [#allocation9], %s628
        // Predicated region
        $region57: #{tpu_custom_call.1} parent=39 // pred_check
          %p630 = pneg %p159
        $region58: #{tpu_custom_call.1} parent=39 // pred_check_branch
          %632 = sbr.rel (%p630) target = $region60
        $region59: #{tpu_custom_call.1} parent=39 // pred_region
          %s633 = smul.u32 4, %s21
          %s635 = ssub.s32 512, 512
          %636 = vsyncadd %s626, %s635
          %s637 = smul.addr %s633, 128
          %s638 = scalar_lea.hbm %s5, %s637
          %s640 = sshll.u32 %s629, 4
          %s641 = int_to_ptr.vmem [resolvable:$true] %s640
          %643 = dma.vmem_to_hbm [thread:$0]  %s641, 512, %s638, %s626
        $region60: #{tpu_custom_call.1} parent=39 // pred_fallthru
          _
      $region40: #{tpu_custom_call.1} parent=5 // pred_fallthru
        _
      %p644 = scmp.le.s32.totalorder 2, %s16
      // Predicated region
      $region61: #{tpu_custom_call.1} parent=5 // pred_check
        %p645 = pneg %p644
      $region62: #{tpu_custom_call.1} parent=5 // pred_check_branch
        %647 = sbr.rel (%p645) target = $region64
      $region63: #{tpu_custom_call.1} parent=5 // pred_region
        %s648 = ssub.s32 %s16, 2
        // Predicated region
        $region65: #{tpu_custom_call.1} parent=63 // pred_check
          %p649 = pneg %p165
        $region66: #{tpu_custom_call.1} parent=63 // pred_check_branch
          %651 = sbr.rel (%p649) target = $region68
        $region67: #{tpu_custom_call.1} parent=63 // pred_region
          %s652 = sand.u32 %s150, 1
          %s653 = scalar_lea.sflag [#allocation4], %s652
          %s654 = sand.u32 %s150, 1
          %s655 = smul.addr %s654, 32
          %s656 = scalar_lea.vmem [#allocation9], %s655
          %657 = dma.done %s653, 512
        $region68: #{tpu_custom_call.1} parent=63 // pred_fallthru
          _
      $region64: #{tpu_custom_call.1} parent=5 // pred_fallthru
        _
    $region6: #{tpu_custom_call.1} parent=1 // loop_footer
      %s20 = sadd.s32 1, %s16
    $region7: #{tpu_custom_call.1} parent=1 // loop_footer_branch
      %15 = sbr.rel target = $region3
    $region8: #{tpu_custom_call.1} parent=1 // loop_exit
      _
    %658 = vsyncpa [#allocation3], 1
    %s659 = scalar_lea.sflag [#allocation3], 1
    %660 = vsyncpa %s659, 1
    %661 = vsyncpa [#allocation6], 1
    %662 = vsyncpa [#allocation4], 1
    %s663 = scalar_lea.sflag [#allocation4], 1
    %664 = vsyncpa %s663, 1

</llo_original>
